<compile_context>
chip_gen: v7x
topology: tpu7x:2x2x1
jax: 0.10.0
libtpu: 0.0.40
codegen_flags: <defaults>
</compile_context>

<pallas_src>
import functools
import math

import jax
import jax.numpy as jnp
from jax.experimental import pallas as pl
from jax.experimental.pallas import tpu as pltpu

_HALF_LOG_2PI = 0.5 * math.log(2.0 * math.pi)


def _round_up(n, m):
    return (n + m - 1) // m * m


def _vmem_capacity_bytes():
    """Physical VMEM of the local chip; conservative fallback if unqueryable."""
    try:
        return int(pltpu.get_tpu_info().vmem_capacity_bytes)
    except Exception:
        return 64 * 1024 * 1024  # v7x per-TensorCore VMEM (smallest of the three)


def _loss_network_kernel(xe_ref, w_aug_ref, wh_ref, bh_ref, out_ref, *, h_dtype):
    # xe_ref   : (d+1, BB)  rows = [x_0 .. x_{d-1} ; eps], batch along lanes
    # w_aug_ref: (H, d+1)   [fc.weight | fc.bias]  (bias absorbed into matmul)
    # wh_ref   : (2, H)     rows = [mean.weight ; log_std.weight]  (h_dtype)
    # bh_ref   : (2, 1)     rows = [mean.bias   ; log_std.bias]    (f32)
    # out_ref  : (2, BB)    rows = [loss_value  ; log_prob]
    d = w_aug_ref.shape[1] - 1
    xe = xe_ref[...]                                  # (d+1, BB) f32
    eps = xe[d:d + 1, :]                              # (1, BB)

    # fc + bias on the MXU:  [W | b] @ [x ; 1]  -> (H, BB); only ReLU on VPU.
    rhs = jnp.concatenate([xe[0:d, :], jnp.ones_like(eps)], axis=0)   # (d+1, BB)
    h = jnp.dot(w_aug_ref[...], rhs, preferred_element_type=jnp.float32)
    h = jnp.maximum(h, 0.0).astype(h_dtype)           # bf16 h: halves VMEM traffic

    # Fused mean / log_std heads: one MXU pass sharing the LHS h.
    # (kept on MXU; an XLU sublane-reduce variant only pays off if profiling
    #  shows the MXU result pop on the critical path.)
    heads = jnp.dot(wh_ref[...], h, preferred_element_type=jnp.float32) + bh_ref[...]
    mu = heads[0:1, :]
    log_std = heads[1:2, :]
    std = jnp.exp(log_std)

    # dist = Normal(mu, std);  loss_value = rsample() = mu + std * eps
    loss_value = mu + std * eps
    # log_prob(loss_value) with (value - mu) == std * eps:
    log_prob = -0.5 * (eps * eps) - log_std - _HALF_LOG_2PI

    # Single lane-dense (2, BB) store.
    out_ref[...] = jnp.concatenate([loss_value, log_prob], axis=0)


def loss_network_forward(x, eps, params, *, block_b=256 * 1024,
                         h_dtype=jnp.bfloat16, vmem_budget_bytes=None):
    """x: (B, input_dim) f32; eps: (B,) or (B, 1) N(0,1) noise.

    Returns (loss_value, log_prob), each of shape (B,)  (torch .squeeze()).
    """
    B, input_dim = x.shape
    hidden = params["fc_w"].shape[0]

    # ---- single stacked lane-dense input slab: rows = [x ; eps] -------------
    if input_dim == 1:
        x_rows = x.reshape(1, B)            # (B,1)->(1,B): free, no-copy layout
    else:
        x_rows = x.T                        # general fallback (one transpose)
    eps_row = eps.reshape(1, B)
    xe = jnp.concatenate([x_rows, eps_row], axis=0).astype(jnp.float32)  # (d+1, B)

    # ---- VMEM-budget-driven block sizing -------------------------------------
    capacity = _vmem_capacity_bytes()
    budget = int(vmem_budget_bytes) if vmem_budget_bytes else int(0.75 * capacity)
    budget = max(8 * 1024 * 1024, min(budget, 100 * 1024 * 1024))
    h_bytes = jnp.dtype(h_dtype).itemsize
    # per-lane VMEM ~ h intermediate + rhs temp + double-buffered in/out + temps
    per_lane = hidden * h_bytes + 12 * (input_dim + 1) + 72

    b128 = _round_up(B, 128)
    bb = min(block_b, max(128, budget // per_lane), b128)
    bb = max(128, (bb // 128) * 128)
    if b128 >= 4 * 128:                     # keep >=4 blocks: megacore + pipeline
        bb = min(bb, _round_up(-(-B // 4), 128))
    b_pad = _round_up(B, bb)
    n_blocks = b_pad // bb

    xe = jnp.pad(xe, ((0, 0), (0, b_pad - B)))

    # ---- weights: bias-augmented fc, fused heads ------------------------------
    w1 = params["fc_w"].astype(jnp.float32)                          # (H, d)
    b1 = params["fc_b"].astype(jnp.float32).reshape(hidden, 1)       # (H, 1)
    w_aug = jnp.concatenate([w1, b1], axis=1)                        # (H, d+1)
    wh = jnp.concatenate([params["mean_w"], params["logstd_w"]],
                         axis=0).astype(h_dtype)                     # (2, H)
    bh = jnp.concatenate([params["mean_b"], params["logstd_b"]],
                         axis=0).astype(jnp.float32).reshape(2, 1)   # (2, 1)

    out = pl.pallas_call(
        functools.partial(_loss_network_kernel, h_dtype=h_dtype),
        out_shape=jax.ShapeDtypeStruct((2, b_pad), jnp.float32),
        grid_spec=pltpu.PrefetchScalarGridSpec(
            num_scalar_prefetch=0,
            grid=(n_blocks,),
            in_specs=[
                pl.BlockSpec((input_dim + 1, bb), lambda i: (0, i)),        # [x;eps]
                pl.BlockSpec((hidden, input_dim + 1), lambda i: (0, 0)),    # [W|b]
                pl.BlockSpec((2, hidden), lambda i: (0, 0)),                # heads W
                pl.BlockSpec((2, 1), lambda i: (0, 0)),                     # heads b
            ],
            out_specs=pl.BlockSpec((2, bb), lambda i: (0, i)),
        ),
        compiler_params=pltpu.CompilerParams(
            dimension_semantics=("parallel",),
            vmem_limit_bytes=budget),
    )(xe, w_aug, wh, bh)

    # Row 0 = loss_value, row 1 = log_prob; strip batch padding.
    return out[0, :B], out[1, :B]


def init_params(key, input_dim=1, hidden_dim=16):
    """Mirror nn.Linear's U(-1/sqrt(fan_in), 1/sqrt(fan_in)) init (torch layouts)."""
    ks = jax.random.split(key, 6)

    def uni(k, shape, fan_in):
        bound = 1.0 / math.sqrt(fan_in)
        return jax.random.uniform(k, shape, jnp.float32, -bound, bound)

    return {
        "fc_w": uni(ks[0], (hidden_dim, input_dim), input_dim),   # Linear.weight
        "fc_b": uni(ks[1], (hidden_dim,), input_dim),
        "mean_w": uni(ks[2], (1, hidden_dim), hidden_dim),
        "mean_b": uni(ks[3], (1,), hidden_dim),
        "logstd_w": uni(ks[4], (1, hidden_dim), hidden_dim),
        "logstd_b": uni(ks[5], (1,), hidden_dim),
    }


def _reference_forward(x, eps, params, h_dtype=jnp.float32):
    """Pure-JAX reference (torch Normal.rsample / log_prob semantics).

    h_dtype=bfloat16 mirrors the kernel's bf16-h fast path for tight checking.
    """
    h = jnp.maximum(x @ params["fc_w"].T + params["fc_b"], 0.0).astype(h_dtype)
    wm = params["mean_w"].astype(h_dtype)
    wl = params["logstd_w"].astype(h_dtype)
    mu = jnp.dot(h, wm.T, preferred_element_type=jnp.float32) + params["mean_b"]
    log_std = jnp.dot(h, wl.T, preferred_element_type=jnp.float32) + params["logstd_b"]
    std = jnp.exp(log_std)
    val = mu + std * eps
    logp = -((val - mu) ** 2) / (2.0 * std * std) - log_std - _HALF_LOG_2PI
    return jnp.squeeze(val), jnp.squeeze(logp)


if __name__ == "__main__":
    key = jax.random.PRNGKey(0)
    k_param, k_x, k_eps = jax.random.split(key, 3)

    B, input_dim, hidden_dim = 256, 1, 16
    params = init_params(k_param, input_dim=input_dim, hidden_dim=hidden_dim)
    x = jax.random.normal(k_x, (B, input_dim), jnp.float32)
    eps = jax.random.normal(k_eps, (B, 1), jnp.float32)    # rsample noise

    # Default fast path (bf16 h); block_b=128 -> 2-block grid to exercise the
    # batch-parallel pipeline even at this tiny demo size.
    val_bf, logp_bf = loss_network_forward(x, eps, params, block_b=128)
    jax.block_until_ready((val_bf, logp_bf))

    # Full-f32 path (tight accuracy), default generation-sized blocking.
    val_f32, logp_f32 = loss_network_forward(x, eps, params, h_dtype=jnp.float32)
    jax.block_until_ready((val_f32, logp_f32))

    with jax.default_matmul_precision("float32"):
        ref_val, ref_logp = _reference_forward(x, eps, params)
        ref_val_bf, ref_logp_bf = _reference_forward(x, eps, params,
                                                     h_dtype=jnp.bfloat16)

    assert val_f32.shape == (B,) and logp_f32.shape == (B,)
    assert val_bf.shape == (B,) and logp_bf.shape == (B,)
    assert jnp.allclose(val_f32, ref_val, atol=1e-4, rtol=1e-4)
    assert jnp.allclose(logp_f32, ref_logp, atol=1e-4, rtol=1e-4)
    assert jnp.allclose(val_bf, ref_val_bf, atol=2e-2, rtol=2e-2)
    assert jnp.allclose(logp_bf, ref_logp_bf, atol=2e-2, rtol=2e-2)

    print("KERNEL_OK")
</pallas_src>

<mosaic_0001>
module attributes {stable_mosaic.version = 11 : i64} {
  func.func @_loss_network_kernel(%arg0: i32, %arg1: memref<2x128xf32, #tpu.memory_space<vmem>>, %arg2: memref<16x2xf32, #tpu.memory_space<vmem>>, %arg3: memref<2x16xbf16, #tpu.memory_space<vmem>>, %arg4: memref<2x1xf32, #tpu.memory_space<vmem>>, %arg5: memref<2x128xf32, #tpu.memory_space<vmem>>) attributes {dimension_semantics = [#tpu.dimension_semantics<parallel>], iteration_bounds = array<i64: 2>, scalar_prefetch = 0 : i64, scratch_operands = 0 : i64, tpu.core_type = #tpu.core_type<tc>, window_params = [{transform_indices = @transform_0, window_bounds = array<i64: 2, 128>}, {pipeline_mode = #tpu.pipeline_mode<synchronous>, transform_indices = @transform_1, window_bounds = array<i64: 16, 2>}, {pipeline_mode = #tpu.pipeline_mode<synchronous>, transform_indices = @transform_2, window_bounds = array<i64: 2, 16>}, {pipeline_mode = #tpu.pipeline_mode<synchronous>, transform_indices = @transform_3, window_bounds = array<i64: 2, 1>}, {transform_indices = @transform_4, window_bounds = array<i64: 2, 128>}]} {
    %c0 = arith.constant 0 : index
    %c0_0 = arith.constant 0 : index
    %0 = vector.load %arg1[%c0, %c0_0] : memref<2x128xf32, #tpu.memory_space<vmem>>, vector<2x128xf32>
    %1 = vector.extract_strided_slice %0 {offsets = [1, 0], sizes = [1, 128], strides = [1, 1]} : vector<2x128xf32> to vector<1x128xf32>
    %2 = vector.extract_strided_slice %0 {offsets = [0, 0], sizes = [1, 128], strides = [1, 1]} : vector<2x128xf32> to vector<1x128xf32>
    %cst = arith.constant 1.000000e+00 : f32
    %3 = vector.broadcast %cst : f32 to vector<1x128xf32>
    %4 = tpu.concatenate %2, %3 in 0 : vector<1x128xf32>, vector<1x128xf32> -> vector<2x128xf32>
    %c0_1 = arith.constant 0 : index
    %c0_2 = arith.constant 0 : index
    %5 = vector.load %arg2[%c0_1, %c0_2] : memref<16x2xf32, #tpu.memory_space<vmem>>, vector<16x2xf32>
    %cst_3 = arith.constant dense<0.000000e+00> : vector<16x128xf32>
    %6 = tpu.matmul %5, %4, %cst_3 {dimension_numbers = #tpu.dot_dimension_numbers<[1], [0], [0], [1], [0, 0, 1, 1], [], []>} : vector<16x2xf32>, vector<2x128xf32>, vector<16x128xf32> -> vector<16x128xf32>
    %cst_4 = arith.constant 0.000000e+00 : f32
    %7 = vector.broadcast %cst_4 : f32 to vector<16x128xf32>
    %8 = arith.maximumf %6, %7 : vector<16x128xf32>
    %9 = arith.truncf %8 : vector<16x128xf32> to vector<16x128xbf16>
    %c0_5 = arith.constant 0 : index
    %c0_6 = arith.constant 0 : index
    %10 = vector.load %arg3[%c0_5, %c0_6] : memref<2x16xbf16, #tpu.memory_space<vmem>>, vector<2x16xbf16>
    %cst_7 = arith.constant dense<0.000000e+00> : vector<2x128xf32>
    %11 = tpu.matmul %10, %9, %cst_7 {dimension_numbers = #tpu.dot_dimension_numbers<[1], [0], [0], [1], [0, 0, 1, 1], [], []>} : vector<2x16xbf16>, vector<16x128xbf16>, vector<2x128xf32> -> vector<2x128xf32>
    %c0_8 = arith.constant 0 : index
    %c0_9 = arith.constant 0 : index
    %12 = vector.load %arg4[%c0_8, %c0_9] : memref<2x1xf32, #tpu.memory_space<vmem>>, vector<2x1xf32>
    %13 = vector.broadcast %12 : vector<2x1xf32> to vector<2x128xf32>
    %14 = arith.addf %11, %13 : vector<2x128xf32>
    %15 = vector.extract_strided_slice %14 {offsets = [0, 0], sizes = [1, 128], strides = [1, 1]} : vector<2x128xf32> to vector<1x128xf32>
    %16 = vector.extract_strided_slice %14 {offsets = [1, 0], sizes = [1, 128], strides = [1, 1]} : vector<2x128xf32> to vector<1x128xf32>
    %17 = math.exp %16 : vector<1x128xf32>
    %18 = arith.mulf %17, %1 : vector<1x128xf32>
    %19 = arith.addf %15, %18 : vector<1x128xf32>
    %20 = arith.mulf %1, %1 : vector<1x128xf32>
    %cst_10 = arith.constant -5.000000e-01 : f32
    %21 = vector.broadcast %cst_10 : f32 to vector<1x128xf32>
    %22 = arith.mulf %21, %20 : vector<1x128xf32>
    %23 = arith.subf %22, %16 : vector<1x128xf32>
    %cst_11 = arith.constant 0.918938517 : f32
    %24 = vector.broadcast %cst_11 : f32 to vector<1x128xf32>
    %25 = arith.subf %23, %24 : vector<1x128xf32>
    %26 = tpu.concatenate %19, %25 in 0 : vector<1x128xf32>, vector<1x128xf32> -> vector<2x128xf32>
    %c0_12 = arith.constant 0 : index
    %c0_13 = arith.constant 0 : index
    %27 = vector.load %arg5[%c0_12, %c0_13] : memref<2x128xf32, #tpu.memory_space<vmem>>, vector<2x128xf32>
    tpu.vector_store %arg5[%c0_12, %c0_13], %26 {strides = array<i32>} : memref<2x128xf32, #tpu.memory_space<vmem>>, vector<2x128xf32>,
    return
  }
  func.func @transform_0(%arg0: i32) -> (i32, i32) {
    %c0_i32 = arith.constant 0 : i32
    %c0_i32_0 = arith.constant 0 : i32
    return %c0_i32, %arg0 : i32, i32
  }
  func.func @transform_1(%arg0: i32) -> (i32, i32) {
    %c0_i32 = arith.constant 0 : i32
    %c0_i32_0 = arith.constant 0 : i32
    %c0_i32_1 = arith.constant 0 : i32
    return %c0_i32, %c0_i32_0 : i32, i32
  }
  func.func @transform_2(%arg0: i32) -> (i32, i32) {
    %c0_i32 = arith.constant 0 : i32
    %c0_i32_0 = arith.constant 0 : i32
    %c0_i32_1 = arith.constant 0 : i32
    return %c0_i32, %c0_i32_0 : i32, i32
  }
  func.func @transform_3(%arg0: i32) -> (i32, i32) {
    %c0_i32 = arith.constant 0 : i32
    %c0_i32_0 = arith.constant 0 : i32
    %c0_i32_1 = arith.constant 0 : i32
    return %c0_i32, %c0_i32_0 : i32, i32
  }
  func.func @transform_4(%arg0: i32) -> (i32, i32) {
    %c0_i32 = arith.constant 0 : i32
    %c0_i32_0 = arith.constant 0 : i32
    return %c0_i32, %arg0 : i32, i32
  }
}

</mosaic_0001>

<llo_original>
// kernel: tpu_custom_call.1
$region0: #{tpu_custom_call.1}
  #allocation0 [shape = 'u32[]', space=smem, size = 0x4, offset = 0x4, fixed_abs, tag = 'smem constant byte address 0x4 - core index']
  #allocation1 [shape = 'u32[144,128]{1,0:T(1,128)}', space=vmem, size = 0x12000, scoped, tag = 'internal scratch']
  %s0 = inlined_call_operand.vmem [shape: f32[2,256], index: 0, kind: input, shape index: {}]
  %s1 = inlined_call_operand.vmem [shape: f32[16,2], index: 1, kind: input, shape index: {}]
  %s2 = inlined_call_operand.vmem [shape: bf16[2,16], index: 2, kind: input, shape index: {}]
  %s3 = inlined_call_operand.vmem [shape: f32[2,1], index: 3, kind: input, shape index: {}]
  %s4 = inlined_call_operand.hbm [shape: f32[2,256], index: 4, kind: output, shape index: {}]
  %s5 = sld [smem:[#allocation0]]
  $region49: #{tpu_custom_call.1} parent=0
    _
  %s7 = ssub.s32 1, %s5
  %s8 = scalar_select 0, %s7, %s5
  $region1: #{tpu_custom_call.1} parent=0
    #allocation2 [shape = 'u8[2048]{0}', space=vmem, size = 0x800, scoped, tag = 'output window, operand 0']
    #allocation3 [shape = 's32[2]{0}', space=sflag, size = 0x8, scoped, tag = 'scoped memory for tpu_custom_call.1']
    %9 = vsyncpa [#allocation3], 0
    %s10 = scalar_lea.sflag [#allocation3], 1
    %11 = vsyncpa %s10, 0
    loop: start=0, step=1, limit=4
    $region2: #{tpu_custom_call.1} parent=1 // loop_pre_header
      _
    $region3: #{tpu_custom_call.1} parent=1 // loop_header
      %s13 = sphi 0, %s17
      %p14 = scmp.ge.s32.totalorder %s13, 4
      %s23 = sphi 0, %s25
      %s26 = sphi 0, %s23
      %s27 = sphi 0, %s26
      %s43 = sphi 0, %s27
      %s47 = sphi 0, %s47
      %s49 = sphi 0, %s47
      %s50 = sphi 0, %s49
      %s64 = sphi 0, %s50
      %s68 = sphi 0, %s68
      %s70 = sphi 0, %s68
      %s71 = sphi 0, %s70
      %s85 = sphi 0, %s71
      %s89 = sphi 0, %s89
      %s91 = sphi 0, %s89
      %s92 = sphi 0, %s91
      %s106 = sphi 0, %s92
      %s112 = sphi 0, %s114
      %s115 = sphi 0, %s112
      %s116 = sphi 0, %s115
      %s132 = sphi 0, %s116
    $region4: #{tpu_custom_call.1} parent=1 // loop_header_branch
      %16 = sbr.rel (%p14) target = $region8
    $region5: #{tpu_custom_call.1} parent=1 // loop_body
      %s18 = ssub.s32 %s13, 1
      %s19 = ssub.s32 %s13, 2
      %s20 = sadd.s32 %s13, 1
      %s21 = ssub.s32 %s13, %s20
      %p22 = scmp.eq.s32.totalorder %s21, 0
      %s24 = sadd.s32 %s23, 1
      %s25 = scalar_select %p22, %s23, %s24
      %p28 = pneg %p22
      %p29 = scmp.eq.s32.totalorder %s13, 1
      %p30 = por %p28, %p29
      %p31 = scmp.ne.s32.totalorder %s23, %s26
      %p32 = scmp.eq.s32.totalorder %s13, 0
      %p33 = por %p31, %p32
      %p34 = scmp.ne.s32.totalorder %s23, %s26
      %p35 = scmp.eq.s32.totalorder %s18, 1
      %p36 = por %p34, %p35
      %p37 = scmp.ne.s32.totalorder %s26, %s27
      %p38 = scmp.eq.s32.totalorder %s18, 0
      %p39 = por %p37, %p38
      %p40 = scmp.ne.s32.totalorder %s26, %s27
      %p41 = scmp.eq.s32.totalorder %s19, 1
      %p42 = por %p40, %p41
      %p44 = scmp.ne.s32.totalorder %s27, %s43
      %p45 = scmp.eq.s32.totalorder %s19, 0
      %p46 = por %p44, %p45
      %s48 = sadd.s32 %s47, 1
      %p51 = scmp.eq.s32.totalorder %s13, 1
      %p52 = scmp.ne.s32.totalorder %s47, %s49
      %p53 = scmp.eq.s32.totalorder %s13, 0
      %p54 = por %p52, %p53
      %p55 = scmp.ne.s32.totalorder %s47, %s49
      %p56 = scmp.eq.s32.totalorder %s18, 1
      %p57 = por %p55, %p56
      %p58 = scmp.ne.s32.totalorder %s49, %s50
      %p59 = scmp.eq.s32.totalorder %s18, 0
      %p60 = por %p58, %p59
      %p61 = scmp.ne.s32.totalorder %s49, %s50
      %p62 = scmp.eq.s32.totalorder %s19, 1
      %p63 = por %p61, %p62
      %p65 = scmp.ne.s32.totalorder %s50, %s64
      %p66 = scmp.eq.s32.totalorder %s19, 0
      %p67 = por %p65, %p66
      %s69 = sadd.s32 %s68, 1
      %p72 = scmp.eq.s32.totalorder %s13, 1
      %p73 = scmp.ne.s32.totalorder %s68, %s70
      %p74 = scmp.eq.s32.totalorder %s13, 0
      %p75 = por %p73, %p74
      %p76 = scmp.ne.s32.totalorder %s68, %s70
      %p77 = scmp.eq.s32.totalorder %s18, 1
      %p78 = por %p76, %p77
      %p79 = scmp.ne.s32.totalorder %s70, %s71
      %p80 = scmp.eq.s32.totalorder %s18, 0
      %p81 = por %p79, %p80
      %p82 = scmp.ne.s32.totalorder %s70, %s71
      %p83 = scmp.eq.s32.totalorder %s19, 1
      %p84 = por %p82, %p83
      %p86 = scmp.ne.s32.totalorder %s71, %s85
      %p87 = scmp.eq.s32.totalorder %s19, 0
      %p88 = por %p86, %p87
      %s90 = sadd.s32 %s89, 1
      %p93 = scmp.eq.s32.totalorder %s13, 1
      %p94 = scmp.ne.s32.totalorder %s89, %s91
      %p95 = scmp.eq.s32.totalorder %s13, 0
      %p96 = por %p94, %p95
      %p97 = scmp.ne.s32.totalorder %s89, %s91
      %p98 = scmp.eq.s32.totalorder %s18, 1
      %p99 = por %p97, %p98
      %p100 = scmp.ne.s32.totalorder %s91, %s92
      %p101 = scmp.eq.s32.totalorder %s18, 0
      %p102 = por %p100, %p101
      %p103 = scmp.ne.s32.totalorder %s91, %s92
      %p104 = scmp.eq.s32.totalorder %s19, 1
      %p105 = por %p103, %p104
      %p107 = scmp.ne.s32.totalorder %s92, %s106
      %p108 = scmp.eq.s32.totalorder %s19, 0
      %p109 = por %p107, %p108
      %s110 = ssub.s32 %s13, %s20
      %p111 = scmp.eq.s32.totalorder %s110, 0
      %s113 = sadd.s32 %s112, 1
      %s114 = scalar_select %p111, %s112, %s113
      %p117 = pneg %p111
      %p118 = scmp.eq.s32.totalorder %s13, 1
      %p119 = por %p117, %p118
      %p120 = scmp.ne.s32.totalorder %s112, %s115
      %p121 = scmp.eq.s32.totalorder %s13, 0
      %p122 = por %p120, %p121
      %p123 = scmp.ne.s32.totalorder %s112, %s115
      %p124 = scmp.eq.s32.totalorder %s18, 1
      %p125 = por %p123, %p124
      %p126 = scmp.ne.s32.totalorder %s115, %s116
      %p127 = scmp.eq.s32.totalorder %s18, 0
      %p128 = por %p126, %p127
      %p129 = scmp.ne.s32.totalorder %s115, %s116
      %p130 = scmp.eq.s32.totalorder %s19, 1
      %p131 = por %p129, %p130
      %p133 = scmp.ne.s32.totalorder %s116, %s132
      %p134 = scmp.eq.s32.totalorder %s19, 0
      %p135 = por %p133, %p134
      %p136 = scmp.le.s32.totalorder 1, %s13
      %p137 = scmp.lt.s32.totalorder %s13, 3
      %p138 = pnand %p136, %p137
      %p139 = pneg %p138
      // Predicated region
      $region9: #{tpu_custom_call.1} parent=5 // pred_check
        _
      $region10: #{tpu_custom_call.1} parent=5 // pred_check_branch
        %141 = sbr.rel (%p138) target = $region12
      $region11: #{tpu_custom_call.1} parent=5 // pred_region
        %s142 = ssub.s32 %s13, 1
        // Predicated region
        $region13: #{tpu_custom_call.1} parent=11 // pred_check
          %p143 = pneg %p60
        $region14: #{tpu_custom_call.1} parent=11 // pred_check_branch
          %145 = sbr.rel (%p143) target = $region16
        $region15: #{tpu_custom_call.1} parent=11 // pred_region
          _
        $region16: #{tpu_custom_call.1} parent=11 // pred_fallthru
          _
        // Predicated region
        $region17: #{tpu_custom_call.1} parent=11 // pred_check
          %p146 = pneg %p81
        $region18: #{tpu_custom_call.1} parent=11 // pred_check_branch
          %148 = sbr.rel (%p146) target = $region20
        $region19: #{tpu_custom_call.1} parent=11 // pred_region
          _
        $region20: #{tpu_custom_call.1} parent=11 // pred_fallthru
          _
        // Predicated region
        $region21: #{tpu_custom_call.1} parent=11 // pred_check
          %p149 = pneg %p102
        $region22: #{tpu_custom_call.1} parent=11 // pred_check_branch
          %151 = sbr.rel (%p149) target = $region24
        $region23: #{tpu_custom_call.1} parent=11 // pred_region
          _
        $region24: #{tpu_custom_call.1} parent=11 // pred_fallthru
          _
      $region12: #{tpu_custom_call.1} parent=5 // pred_fallthru
        _
      %p152 = scmp.lt.s32.totalorder %s13, 2
      // Predicated region
      $region25: #{tpu_custom_call.1} parent=5 // pred_check
        %p153 = pneg %p152
      $region26: #{tpu_custom_call.1} parent=5 // pred_check_branch
        %155 = sbr.rel (%p153) target = $region28
      $region27: #{tpu_custom_call.1} parent=5 // pred_region
        // Predicated region
        $region29: #{tpu_custom_call.1} parent=27 // pred_check
          %p156 = pneg %p33
        $region30: #{tpu_custom_call.1} parent=27 // pred_check_branch
          %158 = sbr.rel (%p156) target = $region32
        $region31: #{tpu_custom_call.1} parent=27 // pred_region
          %p159 = scmp.lt.s32.totalorder %s13, 1
          %s160 = scalar_select %p159, %s13, 1
          %s161 = smul.addr %s160, 2
          %s162 = scalar_lea.vmem %s0, %s161
        $region32: #{tpu_custom_call.1} parent=27 // pred_fallthru
          _
      $region28: #{tpu_custom_call.1} parent=5 // pred_fallthru
        _
      %p163 = scmp.le.s32.totalorder 1, %s13
      %p164 = scmp.lt.s32.totalorder %s13, 3
      %p165 = pnand %p163, %p164
      %p166 = pneg %p165
      // Predicated region
      $region33: #{tpu_custom_call.1} parent=5 // pred_check
        _
      $region34: #{tpu_custom_call.1} parent=5 // pred_check_branch
        %168 = sbr.rel (%p165) target = $region36
      $region35: #{tpu_custom_call.1} parent=5 // pred_region
        %s169 = ssub.s32 %s13, 1
        %p170 = scmp.lt.s32.totalorder %s18, 1
        %s171 = scalar_select %p170, %s18, 1
        %s172 = smul.addr %s171, 2
        %s173 = scalar_lea.vmem %s0, %s172
        %p174 = pneg %p39
        %p175 = pneg %p36
        %p176 = pneg %p60
        %p177 = pneg %p57
        %p178 = pneg %p81
        %p179 = pneg %p78
        %p180 = pneg %p102
        %p181 = pneg %p99
        %p182 = pneg %p128
        %p183 = pneg %p125
        %s184 = sand.u32 %s115, 1
        %s185 = scalar_lea.sflag [#allocation3], %s184
        %s186 = sand.u32 %s115, 1
        %s187 = smul.addr %s186, 2
        %s188 = scalar_lea.vmem [#allocation2], %s187
        %p189 = scmp.lt.s32.totalorder %s18, 1
        %s190 = scalar_select %p189, %s18, 1
        %s191 = smul.addr %s190, 2
        %s192 = scalar_lea.vmem %s0, %s191
        %v194 = vld [vmem:[%s192] sm:$0x3]
        %vm195 = vcmask 1040384
        %v196 = vsel %vm195, %v194, 1.0
        %v197 = vld [vmem:[%s1] sm:$0xff]
        %v198 = vld [vmem:[%s1 + $0x8] sm:$0xff]
        %vm199 = vcmask 15360
        %v201 = vsel %vm199, %v197, 0
        %v204 = vsel %vm199, %v198, 0
        %vm206 = vcmask 1041408
        %v208 = vsel %vm206, %v196, 0
        %210 = vmatprep.subr.mxu0 0.0
        %211 = vmatpush1.msra.mxu0 %v208
        %212 = vmatprep.subr.mxu0 0.0
        %213 = vmatpush1.msra.mxu0 0.0
        %214 = vmatprep.subr.mxu0 0.0
        %215 = vmatpush1.msra.mxu0 0.0
        %216 = vmatprep.subr.mxu0 0.0
        %217 = vmatpush1.msra.mxu0 0.0
        %218 = vmatprep.subr.mxu0 0.0
        %219 = vmatpush1.msra.mxu0 0.0
        %220 = vmatprep.subr.mxu0 0.0
        %221 = vmatpush1.msra.mxu0 0.0
        %222 = vmatprep.subr.mxu0 0.0
        %223 = vmatpush1.msra.mxu0 0.0
        %224 = vmatprep.subr.mxu0 0.0
        %225 = vmatpush1.msra.mxu0 0.0
        %226 = vmatprep.subr.mxu0 0.0
        %227 = vmatpush1.msra.mxu0 0.0
        %228 = vmatprep.subr.mxu0 0.0
        %229 = vmatpush1.msra.mxu0 0.0
        %230 = vmatprep.subr.mxu0 0.0
        %231 = vmatpush1.msra.mxu0 0.0
        %232 = vmatprep.subr.mxu0 0.0
        %233 = vmatpush1.msra.mxu0 0.0
        %234 = vmatprep.subr.mxu0 0.0
        %235 = vmatpush1.msra.mxu0 0.0
        %236 = vmatprep.subr.mxu0 0.0
        %237 = vmatpush1.msra.mxu0 0.0
        %238 = vmatprep.subr.mxu0 0.0
        %239 = vmatpush1.msra.mxu0 0.0
        %240 = vmatprep.subr.mxu0 0.0
        %241 = vmatpush1.msra.mxu0 0.0
        %242 = vmatprep.subr.mxu0 0.0
        %243 = vmatpush1.msra.mxu0 0.0
        %244 = vmatprep.subr.mxu0 0.0
        %245 = vmatpush1.msra.mxu0 0.0
        %246 = vmatprep.subr.mxu0 0.0
        %247 = vmatpush1.msra.mxu0 0.0
        %248 = vmatprep.subr.mxu0 0.0
        %249 = vmatpush1.msra.mxu0 0.0
        %250 = vmatprep.subr.mxu0 0.0
        %251 = vmatpush1.msra.mxu0 0.0
        %252 = vmatprep.subr.mxu0 0.0
        %253 = vmatpush1.msra.mxu0 0.0
        %254 = vmatprep.subr.mxu0 0.0
        %255 = vmatpush1.msra.mxu0 0.0
        %256 = vmatprep.subr.mxu0 0.0
        %257 = vmatpush1.msra.mxu0 0.0
        %258 = vmatprep.subr.mxu0 0.0
        %259 = vmatpush1.msra.mxu0 0.0
        %260 = vmatprep.subr.mxu0 0.0
        %261 = vmatpush1.msra.mxu0 0.0
        %262 = vmatprep.subr.mxu0 0.0
        %263 = vmatpush1.msra.mxu0 0.0
        %264 = vmatprep.subr.mxu0 0.0
        %265 = vmatpush1.msra.mxu0 0.0
        %266 = vmatprep.subr.mxu0 0.0
        %267 = vmatpush1.msra.mxu0 0.0
        %268 = vmatprep.subr.mxu0 0.0
        %269 = vmatpush1.msra.mxu0 0.0
        %270 = vmatprep.subr.mxu0 0.0
        %271 = vmatpush1.msra.mxu0 0.0
        %272 = vmatprep.subr.mxu0 0.0
        %273 = vmatpush1.msra.mxu0 0.0
        %274 = vmatprep.mubr.f32.mxu0 0.0
        %275 = vmatmul.mubr.f32.gmra.mrb[0].mxu0 %v201
        %v276 = vpop.f32.mrb[0].mxu0
        %v277 = vadd.f32 0.0, %v276
        %v278 = vpop.f32.mrb[0].mxu0
        %279 = vmatprep.mubr.f32.mxu0 0.0
        %280 = vmatmul.mubr.f32.gmra.mrb[0].mxu0 %v204
        %v281 = vpop.f32.mrb[0].mxu0
        %v282 = vadd.f32 0.0, %v281
        %v283 = vpop.f32.mrb[0].mxu0
        %284 = vdwg.mxu0
        %v285 = vmax.f32 %v277, 0.0
        %v286 = vmax.f32 %v282, 0.0
        %v287 = vpack.c.bf16 %v286, %v285
        %v288 = vld [vmem:[%s2] sm:$0x1]
        %v289 = vld [vmem:[%s3] sm:$0x3]
        %291 = vset.pattern.permute.xlu0 0
        %292 = vperm.xlu0 %291, %v289
        %v293 = vpop.permute.xlu0 %292
        %vm295 = vcmask 130048
        %v297 = vsel %vm295, %v288, 0
        %299 = vmatprep.subr.bf16.mxu0 0
        %300 = vmatpush1.bf16.msra.mxu0 %v287
        %301 = vmatprep.subr.bf16.mxu0 0
        %302 = vmatpush1.bf16.msra.mxu0 0
        %303 = vmatprep.subr.bf16.mxu0 0
        %304 = vmatpush1.bf16.msra.mxu0 0
        %305 = vmatprep.subr.bf16.mxu0 0
        %306 = vmatpush1.bf16.msra.mxu0 0
        %307 = vmatprep.subr.bf16.mxu0 0
        %308 = vmatpush1.bf16.msra.mxu0 0
        %309 = vmatprep.subr.bf16.mxu0 0
        %310 = vmatpush1.bf16.msra.mxu0 0
        %311 = vmatprep.subr.bf16.mxu0 0
        %312 = vmatpush1.bf16.msra.mxu0 0
        %313 = vmatprep.subr.bf16.mxu0 0
        %314 = vmatpush1.bf16.msra.mxu0 0
        %315 = vmatprep.subr.bf16.mxu0 0
        %316 = vmatpush1.bf16.msra.mxu0 0
        %317 = vmatprep.subr.bf16.mxu0 0
        %318 = vmatpush1.bf16.msra.mxu0 0
        %319 = vmatprep.subr.bf16.mxu0 0
        %320 = vmatpush1.bf16.msra.mxu0 0
        %321 = vmatprep.subr.bf16.mxu0 0
        %322 = vmatpush1.bf16.msra.mxu0 0
        %323 = vmatprep.subr.bf16.mxu0 0
        %324 = vmatpush1.bf16.msra.mxu0 0
        %325 = vmatprep.subr.bf16.mxu0 0
        %326 = vmatpush1.bf16.msra.mxu0 0
        %327 = vmatprep.subr.bf16.mxu0 0
        %328 = vmatpush1.bf16.msra.mxu0 0
        %329 = vmatprep.subr.bf16.mxu0 0
        %330 = vmatpush1.bf16.msra.mxu0 0
        %331 = vmatprep.mubr.bf16.mxu0 0
        %332 = vmatmul.mubr.bf16.gmra.mrb[0].mxu0 %v297
        %v333 = vpop.f32.mrb[0].mxu0
        %v334 = vadd.f32 %v293, %v333
        %v335 = vpop.f32.mrb[0].mxu0
        %v336 = vpop.f32.mrb[0].mxu0
        %v337 = vpop.f32.mrb[0].mxu0
        %338 = vdwg.mxu0
        %v339 = vmul.f32 %v334, 1.442695
        %v340 = vpow.pop %v339
        %v341 = vmul.f32 %v340, %v194
        %v343 = vrot.slane %v341, 1
        %v345 = vadd.f32 %v334, %v343
        %v346 = vmul.f32 %v194, %v194
        %v347 = vmul.f32 %v346, -0.5
        %v348 = vsub.f32 %v347, %v334
        %v349 = vsub.f32 %v348, 0.9189385
        %v350 = vsel %vm195, %v345, %v349
        %351 = vst [vmem:[%s188] sm:$0x3] %v350
        %s352 = sand.u32 %s115, 1
        %s353 = scalar_lea.sflag [#allocation3], %s352
        %s354 = sand.u32 %s115, 1
        %s355 = smul.addr %s354, 2
        %s356 = scalar_lea.vmem [#allocation2], %s355
        // Predicated region
        $region37: #{tpu_custom_call.1} parent=35 // pred_check
          %p357 = pneg %p125
        $region38: #{tpu_custom_call.1} parent=35 // pred_check_branch
          %359 = sbr.rel (%p357) target = $region40
        $region39: #{tpu_custom_call.1} parent=35 // pred_region
          %s361 = ssub.s32 32, 32
          %362 = vsyncadd %s353, %s361
          %s363 = smul.addr %s18, 32
          %s364 = scalar_lea.hbm %s4, %s363
          %s366 = sshll.u32 %s356, 4
          %s367 = int_to_ptr.vmem [resolvable:$true] %s366
          %369 = dma.vmem_to_hbm [thread:$0]  %s367, 32, %s364, %s353
        $region40: #{tpu_custom_call.1} parent=35 // pred_fallthru
          _
      $region36: #{tpu_custom_call.1} parent=5 // pred_fallthru
        _
      %p370 = scmp.le.s32.totalorder 2, %s13
      // Predicated region
      $region41: #{tpu_custom_call.1} parent=5 // pred_check
        %p371 = pneg %p370
      $region42: #{tpu_custom_call.1} parent=5 // pred_check_branch
        %373 = sbr.rel (%p371) target = $region44
      $region43: #{tpu_custom_call.1} parent=5 // pred_region
        %s374 = ssub.s32 %s13, 2
        // Predicated region
        $region45: #{tpu_custom_call.1} parent=43 // pred_check
          %p375 = pneg %p131
        $region46: #{tpu_custom_call.1} parent=43 // pred_check_branch
          %377 = sbr.rel (%p375) target = $region48
        $region47: #{tpu_custom_call.1} parent=43 // pred_region
          %s378 = sand.u32 %s116, 1
          %s379 = scalar_lea.sflag [#allocation3], %s378
          %s380 = sand.u32 %s116, 1
          %s381 = smul.addr %s380, 2
          %s382 = scalar_lea.vmem [#allocation2], %s381
          %383 = dma.done %s379, 32
        $region48: #{tpu_custom_call.1} parent=43 // pred_fallthru
          _
      $region44: #{tpu_custom_call.1} parent=5 // pred_fallthru
        _
    $region6: #{tpu_custom_call.1} parent=1 // loop_footer
      %s17 = sadd.s32 1, %s13
    $region7: #{tpu_custom_call.1} parent=1 // loop_footer_branch
      %12 = sbr.rel target = $region3
    $region8: #{tpu_custom_call.1} parent=1 // loop_exit
      _
    %384 = vsyncpa [#allocation3], 1
    %s385 = scalar_lea.sflag [#allocation3], 1
    %386 = vsyncpa %s385, 1

</llo_original>
